<compile_context>
chip_gen: v7x
topology: tpu7x:2x2x1
jax: 0.10.0
libtpu: 0.0.40
codegen_flags: <defaults>
</compile_context>

<pallas_src>
import functools
import math

import jax
import jax.numpy as jnp
from jax.experimental import pallas as pl
from jax.experimental.pallas import tpu as pltpu


def _round_up(x, m):
    return ((x + m - 1) // m) * m


def _largest_divisor_tile(dim_p, cap=512):
    """Largest power-of-two*128 tile <= cap dividing dim_p (dim_p % 128 == 0)."""
    for t in (1024, 512, 256, 128):
        if t <= cap and dim_p % t == 0:
            return t
    return 128


def _vmem_budget_bytes():
    """Per-core VMEM budget, leaving headroom for Mosaic internal scratch."""
    try:
        cap = pltpu.get_tpu_info().vmem_capacity_bytes
    except Exception:
        cap = 64 * 1024 * 1024  # unknown chip -> assume v7x-sized VMEM
    return max(32 * 1024 * 1024, int(cap) - 16 * 1024 * 1024)


# ---------------- Kernel 1:  XW = feat @ W  (tiled accumulator matmul) -------

def _xw_kernel(feat_ref, w_ref, xw_ref, acc_ref):
    c = pl.program_id(2)

    @pl.when(c == 0)
    def _():
        acc_ref[...] = jnp.zeros_like(acc_ref)

    acc_ref[...] += jnp.dot(feat_ref[...], w_ref[...],
                            preferred_element_type=jnp.float32)

    @pl.when(c == pl.num_programs(2) - 1)
    def _():
        xw_ref[...] = acc_ref[...].astype(xw_ref.dtype)


# ---------------- Kernel 2:  out = adj @ XW  (tiled accumulator matmul) ------

def _adj_matmul_kernel(adj_ref, xw_ref, out_ref, acc_ref, *,
                       n, tk, mask_k, xw_resident):
    k = pl.program_id(1)

    @pl.when(k == 0)
    def _():
        acc_ref[...] = jnp.zeros_like(acc_ref)

    adj_t = adj_ref[...]
    if mask_k:
        # Ragged K edge: out-of-bounds columns of the adj tile hold garbage;
        # zero them so they cannot pollute valid rows of the accumulator.
        col = jax.lax.broadcasted_iota(jnp.int32, adj_t.shape, 1)
        adj_t = jnp.where(col < (n - k * tk), adj_t, jnp.zeros_like(adj_t))
    adj_bf = adj_t.astype(jnp.bfloat16)   # in-kernel cast, hidden under DMA

    if xw_resident:
        off = pl.multiple_of(k * tk, 128)
        xw_t = xw_ref[pl.ds(off, tk), :]
    else:
        xw_t = xw_ref[...]

    acc_ref[...] += jnp.dot(adj_bf, xw_t, preferred_element_type=jnp.float32)

    @pl.when(k == pl.num_programs(1) - 1)
    def _():
        out_ref[...] = acc_ref[...].astype(out_ref.dtype)


# ---------------- Wrapper ----------------------------------------------------

def encoder_forward(feat, weight, adj, *, tm=None, tk=None, xw_resident=None,
                    compute_dtype=jnp.bfloat16):
    """out = adj @ (feat @ weight)   (Encoder.forward; act/dropout unused).

    adj is streamed in its own dtype (f32 or a pre-converted bf16) with no
    wrapper-side pad/cast pass; feat/weight pads are cheap (not N^2).
    """
    n, in_feat = feat.shape
    assert weight.shape[0] == in_feat
    out_feat = weight.shape[1]
    assert adj.shape == (n, n)
    out_dtype = feat.dtype

    n128 = _round_up(n, 128)
    k_p = _round_up(in_feat, 128)      # MXU-friendly contraction depth
    f_p = _round_up(out_feat, 128)     # lane-dense output width

    budget = _vmem_budget_bytes()
    adj_bytes = adj.dtype.itemsize
    out_bytes = jnp.dtype(out_dtype).itemsize
    xw_bytes = jnp.dtype(compute_dtype).itemsize
    slack = 2 * 1024 * 1024            # Mosaic internal scratch headroom

    # Keep >= 2 row tiles when possible so the "parallel" row axis can split
    # across v7x's two TensorCores (harmless on single-core v5e/v6e).
    tm_cap = 128 if n128 <= 128 else _round_up(-(-n128 // 2), 128)

    def s2_footprint(tm_, tk_, resident, k_np_):
        f = 2 * tm_ * tk_ * adj_bytes          # double-buffered adj tile
        f += 2 * tm_ * f_p * out_bytes         # double-buffered out tile
        f += tm_ * f_p * 4                     # f32 accumulator
        if resident:
            f += 2 * k_np_ * f_p * xw_bytes    # whole XW (conservative x2)
        else:
            f += 2 * tk_ * f_p * xw_bytes      # double-buffered XW tile
        return f + slack

    if tm is None or tk is None:
        cand_tm, cand_tk = 128, 128
        for t in (2048, 1024, 512, 256, 128):
            tm_ = min(t, tm_cap, n128)
            tk_ = min(t, n128)
            if s2_footprint(tm_, tk_, False, _round_up(n, tk_)) <= budget:
                cand_tm, cand_tk = tm_, tk_
                break
        if tm is None:
            tm = cand_tm
        if tk is None:
            tk = cand_tk
    tm = min(_round_up(tm, 128), n128)
    tk = min(_round_up(tk, 128), n128)

    grid_m = pl.cdiv(n, tm)
    grid_k = pl.cdiv(n, tk)
    m_p = grid_m * tm                  # padded output rows
    k_np = grid_k * tk                 # padded rows of XW / feat

    # Pin XW in VMEM for the whole stage-2 run when it fits (loaded once).
    if xw_resident is None:
        xw_resident = s2_footprint(tm, tk, True, k_np) <= budget

    vmem_limit = int(budget)

    # ---- stage 1: XW = feat @ W  (cheap pads on the N x in_feat side only) --
    feat_p = jnp.pad(feat, ((0, k_np - n), (0, k_p - in_feat))).astype(compute_dtype)
    w_p = jnp.pad(weight, ((0, k_p - in_feat), (0, f_p - out_feat))).astype(compute_dtype)

    tm1 = _largest_divisor_tile(k_np, cap=512)
    tf = _largest_divisor_tile(f_p, cap=512)
    tc = _largest_divisor_tile(k_p, cap=512)

    xw = pl.pallas_call(
        _xw_kernel,
        out_shape=jax.ShapeDtypeStruct((k_np, f_p), compute_dtype),
        grid_spec=pltpu.PrefetchScalarGridSpec(
            num_scalar_prefetch=0,
            grid=(k_np // tm1, f_p // tf, k_p // tc),
            in_specs=[
                pl.BlockSpec((tm1, tc), lambda i, j, c: (i, c)),
                pl.BlockSpec((tc, tf), lambda i, j, c: (c, j)),
            ],
            out_specs=pl.BlockSpec((tm1, tf), lambda i, j, c: (i, j)),
            scratch_shapes=[pltpu.VMEM((tm1, tf), jnp.float32)],
        ),
        compiler_params=pltpu.CompilerParams(
            dimension_semantics=("parallel", "parallel", "arbitrary"),
            vmem_limit_bytes=vmem_limit,
        ),
    )(feat_p, w_p)

    # ---- stage 2: out = adj @ XW  (adj streamed as-is, no pre-pass) ---------
    mask_k = (n % tk) != 0
    if xw_resident:
        xw_spec = pl.BlockSpec((k_np, f_p), lambda i, k: (0, 0))
    else:
        xw_spec = pl.BlockSpec((tk, f_p), lambda i, k: (k, 0))

    kernel = functools.partial(_adj_matmul_kernel, n=n, tk=tk,
                               mask_k=mask_k, xw_resident=xw_resident)

    out_p = pl.pallas_call(
        kernel,
        out_shape=jax.ShapeDtypeStruct((m_p, f_p), out_dtype),
        grid_spec=pltpu.PrefetchScalarGridSpec(
            num_scalar_prefetch=0,
            grid=(grid_m, grid_k),
            in_specs=[
                pl.BlockSpec((tm, tk), lambda i, k: (i, k)),
                xw_spec,
            ],
            out_specs=pl.BlockSpec((tm, f_p), lambda i, k: (i, 0)),
            scratch_shapes=[pltpu.VMEM((tm, f_p), jnp.float32)],
        ),
        compiler_params=pltpu.CompilerParams(
            dimension_semantics=("parallel", "arbitrary"),
            vmem_limit_bytes=vmem_limit,
        ),
    )(adj, xw)

    return out_p[:n, :out_feat]


# ---------------- Demo / self-test -------------------------------------------

def xavier_uniform(key, in_feat, out_feat, dtype=jnp.float32):
    # Matches torch.nn.init.xavier_uniform_ for an (in_feat, out_feat) matrix.
    bound = math.sqrt(6.0 / (in_feat + out_feat))
    return jax.random.uniform(
        key, (in_feat, out_feat), dtype=dtype, minval=-bound, maxval=bound
    )


def _make_inputs(key, n, in_feat, out_feat):
    k_feat, k_adj, k_w = jax.random.split(key, 3)
    feat = jax.random.normal(k_feat, (n, in_feat), dtype=jnp.float32)
    # Deterministic synthetic (dense) adjacency: symmetric, row-normalized.
    adj_raw = (jax.random.uniform(k_adj, (n, n)) > 0.8).astype(jnp.float32)
    adj_raw = adj_raw + adj_raw.T + jnp.eye(n, dtype=jnp.float32)
    adj_raw = jnp.minimum(adj_raw, 1.0)
    adj = adj_raw / jnp.sum(adj_raw, axis=1, keepdims=True)
    weight = xavier_uniform(k_w, in_feat, out_feat)
    return feat, weight, adj


def _check(out, feat, weight, adj, tag):
    # Reference 1: same bf16 input quantization as the kernel, f32 math.
    feat_q = feat.astype(jnp.bfloat16).astype(jnp.float32)
    w_q = weight.astype(jnp.bfloat16).astype(jnp.float32)
    adj_q = adj.astype(jnp.bfloat16).astype(jnp.float32)
    xw_q = (feat_q @ w_q).astype(jnp.bfloat16).astype(jnp.float32)
    ref_q = adj_q @ xw_q
    assert jnp.allclose(out, ref_q, atol=2e-3, rtol=2e-3), \
        f"{tag}: mismatch vs bf16-quantized reference"
    # Reference 2: plain f32 reference of the PyTorch forward (loose tol).
    ref_f32 = adj @ (feat @ weight)
    assert jnp.allclose(out, ref_f32, atol=3e-2, rtol=3e-2), \
        f"{tag}: mismatch vs f32 reference"


if __name__ == "__main__":
    key = jax.random.PRNGKey(0)
    k_a, k_b = jax.random.split(key)

    # A) aligned N, auto tile plan (resident XW path, 2 parallel row tiles).
    N, IN_FEAT, OUT_FEAT = 256, 96, 32
    feat, weight, adj = _make_inputs(k_a, N, IN_FEAT, OUT_FEAT)
    out = jax.block_until_ready(encoder_forward(feat, weight, adj))
    assert out.shape == (N, OUT_FEAT)
    _check(out, feat, weight, adj, "auto plan")

    # B) ragged N (300 % 128 != 0), small forced tiles: exercises the K-edge
    #    mask, multi-step K accumulation, and the resident-XW pl.ds slicing.
    N2 = 300
    feat2, weight2, adj2 = _make_inputs(k_b, N2, IN_FEAT, OUT_FEAT)
    out2 = jax.block_until_ready(
        encoder_forward(feat2, weight2, adj2, tm=128, tk=128, xw_resident=True))
    assert out2.shape == (N2, OUT_FEAT)
    _check(out2, feat2, weight2, adj2, "ragged/resident")

    # C) same problem through the tiled-XW fallback path.
    out3 = jax.block_until_ready(
        encoder_forward(feat2, weight2, adj2, tm=128, tk=128, xw_resident=False))
    _check(out3, feat2, weight2, adj2, "ragged/tiled")

    print("KERNEL_OK")
</pallas_src>

<mosaic_0001>
module attributes {stable_mosaic.version = 11 : i64} {
  func.func @_xw_kernel(%arg0: i32, %arg1: i32, %arg2: i32, %arg3: memref<256x128xbf16, #tpu.memory_space<vmem>>, %arg4: memref<128x128xbf16, #tpu.memory_space<vmem>>, %arg5: memref<256x128xbf16, #tpu.memory_space<vmem>>, %arg6: memref<256x128xf32, #tpu.memory_space<vmem>>) attributes {dimension_semantics = [#tpu.dimension_semantics<parallel>, #tpu.dimension_semantics<parallel>, #tpu.dimension_semantics<arbitrary>], iteration_bounds = array<i64: 1, 1, 1>, scalar_prefetch = 0 : i64, scratch_operands = 1 : i64, tpu.core_type = #tpu.core_type<tc>, window_params = [{transform_indices = @transform_0, window_bounds = array<i64: 256, 128>}, {transform_indices = @transform_1, window_bounds = array<i64: 128, 128>}, {transform_indices = @transform_2, window_bounds = array<i64: 256, 128>}]} {
    %c0_i32 = arith.constant 0 : i32
    %0 = arith.cmpi eq, %arg2, %c0_i32 : i32
    %1 = arith.extui %0 : i1 to i32
    %c0_i32_0 = arith.constant 0 : i32
    %2 = arith.cmpi ne, %1, %c0_i32_0 : i32
    scf.if %2 {
      %cst_10 = arith.constant 0.000000e+00 : f32
      %12 = vector.broadcast %cst_10 : f32 to vector<256x128xf32>
      %c0_11 = arith.constant 0 : index
      %c0_12 = arith.constant 0 : index
      %13 = vector.load %arg6[%c0_11, %c0_12] : memref<256x128xf32, #tpu.memory_space<vmem>>, vector<256x128xf32>
      tpu.vector_store %arg6[%c0_11, %c0_12], %12 {strides = array<i32>} : memref<256x128xf32, #tpu.memory_space<vmem>>, vector<256x128xf32>,
    } else {
    }
    %c0 = arith.constant 0 : index
    %c0_1 = arith.constant 0 : index
    %3 = vector.load %arg6[%c0, %c0_1] : memref<256x128xf32, #tpu.memory_space<vmem>>, vector<256x128xf32>
    %c0_2 = arith.constant 0 : index
    %c0_3 = arith.constant 0 : index
    %4 = vector.load %arg3[%c0_2, %c0_3] : memref<256x128xbf16, #tpu.memory_space<vmem>>, vector<256x128xbf16>
    %c0_4 = arith.constant 0 : index
    %c0_5 = arith.constant 0 : index
    %5 = vector.load %arg4[%c0_4, %c0_5] : memref<128x128xbf16, #tpu.memory_space<vmem>>, vector<128x128xbf16>
    %cst = arith.constant dense<0.000000e+00> : vector<256x128xf32>
    %6 = tpu.matmul %4, %5, %cst {dimension_numbers = #tpu.dot_dimension_numbers<[1], [0], [0], [1], [0, 0, 1, 1], [], []>} : vector<256x128xbf16>, vector<128x128xbf16>, vector<256x128xf32> -> vector<256x128xf32>
    %7 = arith.addf %3, %6 : vector<256x128xf32>
    %c0_6 = arith.constant 0 : index
    %c0_7 = arith.constant 0 : index
    %8 = vector.load %arg6[%c0_6, %c0_7] : memref<256x128xf32, #tpu.memory_space<vmem>>, vector<256x128xf32>
    tpu.vector_store %arg6[%c0_6, %c0_7], %7 {strides = array<i32>} : memref<256x128xf32, #tpu.memory_space<vmem>>, vector<256x128xf32>,
    %c0_i32_8 = arith.constant 0 : i32
    %9 = arith.cmpi eq, %arg2, %c0_i32_8 : i32
    %10 = arith.extui %9 : i1 to i32
    %c0_i32_9 = arith.constant 0 : i32
    %11 = arith.cmpi ne, %10, %c0_i32_9 : i32
    scf.if %11 {
      %c0_10 = arith.constant 0 : index
      %c0_11 = arith.constant 0 : index
      %12 = vector.load %arg6[%c0_10, %c0_11] : memref<256x128xf32, #tpu.memory_space<vmem>>, vector<256x128xf32>
      %13 = arith.truncf %12 : vector<256x128xf32> to vector<256x128xbf16>
      %c0_12 = arith.constant 0 : index
      %c0_13 = arith.constant 0 : index
      %14 = vector.load %arg5[%c0_12, %c0_13] : memref<256x128xbf16, #tpu.memory_space<vmem>>, vector<256x128xbf16>
      tpu.vector_store %arg5[%c0_12, %c0_13], %13 {strides = array<i32>} : memref<256x128xbf16, #tpu.memory_space<vmem>>, vector<256x128xbf16>,
    } else {
    }
    return
  }
  func.func @transform_0(%arg0: i32, %arg1: i32, %arg2: i32) -> (i32, i32) {
    %c0_i32 = arith.constant 0 : i32
    return %arg0, %arg2 : i32, i32
  }
  func.func @transform_1(%arg0: i32, %arg1: i32, %arg2: i32) -> (i32, i32) {
    %c0_i32 = arith.constant 0 : i32
    return %arg2, %arg1 : i32, i32
  }
  func.func @transform_2(%arg0: i32, %arg1: i32, %arg2: i32) -> (i32, i32) {
    %c0_i32 = arith.constant 0 : i32
    return %arg0, %arg1 : i32, i32
  }
}

</mosaic_0001>

<llo_original>
// kernel: tpu_custom_call.1
$region0: #{tpu_custom_call.1}
  #allocation0 [shape = 'u32[]', space=smem, size = 0x4, offset = 0x4, fixed_abs, tag = 'smem constant byte address 0x4 - core index']
  #allocation1 [shape = 'u32[144,128]{1,0:T(1,128)}', space=vmem, size = 0x12000, scoped, tag = 'internal scratch']
  #allocation2 [shape = 'f32[256,128]{1,0:T(8,128)}', space=vmem, size = 0x20000, scoped, tag = 'scratch operand']
  %s0 = inlined_call_operand.hbm [shape: bf16[256,128], index: 0, kind: input, shape index: {}]
  %s1 = inlined_call_operand.hbm [shape: bf16[128,128], index: 1, kind: input, shape index: {}]
  %s2 = inlined_call_operand.hbm [shape: bf16[256,128], index: 2, kind: output, shape index: {}]
  %s3 = sld [smem:[#allocation0]]
  $region34: #{tpu_custom_call.1} parent=0
    _
  %s5 = ssub.s32 1, %s3
  %s6 = scalar_select 0, %s5, %s3
  $region1: #{tpu_custom_call.1} parent=0
    #allocation3 [shape = 'u8[65536]{0}', space=vmem, size = 0x10000, scoped, tag = 'input window, operand 0, single buffered']
    #allocation4 [shape = 's32[1]{0}', space=sflag, size = 0x4, scoped, tag = 'scoped memory for tpu_custom_call.1']
    #allocation5 [shape = 's32[1]{0}', space=sflag, size = 0x4, scoped, tag = 'scoped memory for tpu_custom_call.1']
    #allocation6 [shape = 'u8[32768]{0}', space=vmem, size = 0x8000, scoped, tag = 'input window, operand 1, single buffered']
    #allocation7 [shape = 's32[1]{0}', space=sflag, size = 0x4, scoped, tag = 'scoped memory for tpu_custom_call.1']
    #allocation8 [shape = 'u8[65536]{0}', space=vmem, size = 0x10000, scoped, tag = 'output window, operand 0, single buffered']
    %7 = vsyncpa [#allocation4], 0
    %8 = vsyncpa [#allocation7], 0
    %9 = vsyncpa [#allocation5], 0
    // Predicated region
    $region2: #{tpu_custom_call.1} parent=1 // pred_check
      _
    $region3: #{tpu_custom_call.1} parent=1 // pred_check_branch
      %11 = sbr.rel (0) target = $region5
    $region4: #{tpu_custom_call.1} parent=1 // pred_region
      %s13 = ssub.s32 2048, 2048
      %14 = vsyncadd [#allocation4], %s13
      %s15 = sshll.u32 [#allocation3], 4
      %s16 = int_to_ptr.vmem [resolvable:$true] %s15
      %21 = dma.hbm_to_vmem [thread:$0]  %s0, 2048, %s16, [#allocation4], 64, 64, 4
    $region5: #{tpu_custom_call.1} parent=1 // pred_fallthru
      _
    // Predicated region
    $region6: #{tpu_custom_call.1} parent=1 // pred_check
      _
    $region7: #{tpu_custom_call.1} parent=1 // pred_check_branch
      %23 = sbr.rel (0) target = $region9
    $region8: #{tpu_custom_call.1} parent=1 // pred_region
      %s25 = ssub.s32 1024, 1024
      %26 = vsyncadd [#allocation7], %s25
      %s27 = sshll.u32 [#allocation6], 4
      %s28 = int_to_ptr.vmem [resolvable:$true] %s27
      %33 = dma.hbm_to_vmem [thread:$0]  %s1, 1024, %s28, [#allocation7], 64, 64, 4
    $region9: #{tpu_custom_call.1} parent=1 // pred_fallthru
      _
    // Predicated region
    $region10: #{tpu_custom_call.1} parent=1 // pred_check
      _
    $region11: #{tpu_custom_call.1} parent=1 // pred_check_branch
      %35 = sbr.rel (0) target = $region13
    $region12: #{tpu_custom_call.1} parent=1 // pred_region
      %36 = dma.done [#allocation4], 2048
    $region13: #{tpu_custom_call.1} parent=1 // pred_fallthru
      _
    // Predicated region
    $region14: #{tpu_custom_call.1} parent=1 // pred_check
      _
    $region15: #{tpu_custom_call.1} parent=1 // pred_check_branch
      %38 = sbr.rel (0) target = $region17
    $region16: #{tpu_custom_call.1} parent=1 // pred_region
      %39 = dma.done [#allocation7], 1024
    $region17: #{tpu_custom_call.1} parent=1 // pred_fallthru
      _
    %p41 = scmp.eq.s32.totalorder 0, 0
    // Predicated region
    $region18: #{tpu_custom_call.1} parent=1 // pred_check
      %p42 = pneg %p41
    $region19: #{tpu_custom_call.1} parent=1 // pred_check_branch
      %44 = sbr.rel (%p42) target = $region21
    $region20: #{tpu_custom_call.1} parent=1 // pred_region
      %45 = vst [vmem:[#allocation2] sm:$0xff] 0.0
      %46 = vst [vmem:[#allocation2 + $0x8] sm:$0xff] 0.0
      %47 = vst [vmem:[#allocation2 + $0x10] sm:$0xff] 0.0
      %48 = vst [vmem:[#allocation2 + $0x18] sm:$0xff] 0.0
      %49 = vst [vmem:[#allocation2 + $0x20] sm:$0xff] 0.0
      %50 = vst [vmem:[#allocation2 + $0x28] sm:$0xff] 0.0
      %51 = vst [vmem:[#allocation2 + $0x30] sm:$0xff] 0.0
      %52 = vst [vmem:[#allocation2 + $0x38] sm:$0xff] 0.0
      %53 = vst [vmem:[#allocation2 + $0x40] sm:$0xff] 0.0
      %54 = vst [vmem:[#allocation2 + $0x48] sm:$0xff] 0.0
      %55 = vst [vmem:[#allocation2 + $0x50] sm:$0xff] 0.0
      %56 = vst [vmem:[#allocation2 + $0x58] sm:$0xff] 0.0
      %57 = vst [vmem:[#allocation2 + $0x60] sm:$0xff] 0.0
      %58 = vst [vmem:[#allocation2 + $0x68] sm:$0xff] 0.0
      %59 = vst [vmem:[#allocation2 + $0x70] sm:$0xff] 0.0
      %60 = vst [vmem:[#allocation2 + $0x78] sm:$0xff] 0.0
      %61 = vst [vmem:[#allocation2 + $0x80] sm:$0xff] 0.0
      %62 = vst [vmem:[#allocation2 + $0x88] sm:$0xff] 0.0
      %63 = vst [vmem:[#allocation2 + $0x90] sm:$0xff] 0.0
      %64 = vst [vmem:[#allocation2 + $0x98] sm:$0xff] 0.0
      %65 = vst [vmem:[#allocation2 + $0xa0] sm:$0xff] 0.0
      %66 = vst [vmem:[#allocation2 + $0xa8] sm:$0xff] 0.0
      %67 = vst [vmem:[#allocation2 + $0xb0] sm:$0xff] 0.0
      %68 = vst [vmem:[#allocation2 + $0xb8] sm:$0xff] 0.0
      %69 = vst [vmem:[#allocation2 + $0xc0] sm:$0xff] 0.0
      %70 = vst [vmem:[#allocation2 + $0xc8] sm:$0xff] 0.0
      %71 = vst [vmem:[#allocation2 + $0xd0] sm:$0xff] 0.0
      %72 = vst [vmem:[#allocation2 + $0xd8] sm:$0xff] 0.0
      %73 = vst [vmem:[#allocation2 + $0xe0] sm:$0xff] 0.0
      %74 = vst [vmem:[#allocation2 + $0xe8] sm:$0xff] 0.0
      %75 = vst [vmem:[#allocation2 + $0xf0] sm:$0xff] 0.0
      %76 = vst [vmem:[#allocation2 + $0xf8] sm:$0xff] 0.0
    $region21: #{tpu_custom_call.1} parent=1 // pred_fallthru
      _
    %v77 = vld [vmem:[#allocation2] sm:$0xff]
    %v78 = vld [vmem:[#allocation2 + $0x8] sm:$0xff]
    %v79 = vld [vmem:[#allocation2 + $0x10] sm:$0xff]
    %v80 = vld [vmem:[#allocation2 + $0x18] sm:$0xff]
    %v81 = vld [vmem:[#allocation2 + $0x20] sm:$0xff]
    %v82 = vld [vmem:[#allocation2 + $0x28] sm:$0xff]
    %v83 = vld [vmem:[#allocation2 + $0x30] sm:$0xff]
    %v84 = vld [vmem:[#allocation2 + $0x38] sm:$0xff]
    %v85 = vld [vmem:[#allocation2 + $0x40] sm:$0xff]
    %v86 = vld [vmem:[#allocation2 + $0x48] sm:$0xff]
    %v87 = vld [vmem:[#allocation2 + $0x50] sm:$0xff]
    %v88 = vld [vmem:[#allocation2 + $0x58] sm:$0xff]
    %v89 = vld [vmem:[#allocation2 + $0x60] sm:$0xff]
    %v90 = vld [vmem:[#allocation2 + $0x68] sm:$0xff]
    %v91 = vld [vmem:[#allocation2 + $0x70] sm:$0xff]
    %v92 = vld [vmem:[#allocation2 + $0x78] sm:$0xff]
    %v93 = vld [vmem:[#allocation2 + $0x80] sm:$0xff]
    %v94 = vld [vmem:[#allocation2 + $0x88] sm:$0xff]
    %v95 = vld [vmem:[#allocation2 + $0x90] sm:$0xff]
    %v96 = vld [vmem:[#allocation2 + $0x98] sm:$0xff]
    %v97 = vld [vmem:[#allocation2 + $0xa0] sm:$0xff]
    %v98 = vld [vmem:[#allocation2 + $0xa8] sm:$0xff]
    %v99 = vld [vmem:[#allocation2 + $0xb0] sm:$0xff]
    %v100 = vld [vmem:[#allocation2 + $0xb8] sm:$0xff]
    %v101 = vld [vmem:[#allocation2 + $0xc0] sm:$0xff]
    %v102 = vld [vmem:[#allocation2 + $0xc8] sm:$0xff]
    %v103 = vld [vmem:[#allocation2 + $0xd0] sm:$0xff]
    %v104 = vld [vmem:[#allocation2 + $0xd8] sm:$0xff]
    %v105 = vld [vmem:[#allocation2 + $0xe0] sm:$0xff]
    %v106 = vld [vmem:[#allocation2 + $0xe8] sm:$0xff]
    %v107 = vld [vmem:[#allocation2 + $0xf0] sm:$0xff]
    %v108 = vld [vmem:[#allocation2 + $0xf8] sm:$0xff]
    %v109 = vld [vmem:[#allocation3] sm:$0xf]
    %v110 = vld [vmem:[#allocation3 + $0x4] sm:$0xf]
    %v111 = vld [vmem:[#allocation3 + $0x8] sm:$0xf]
    %v112 = vld [vmem:[#allocation3 + $0xc] sm:$0xf]
    %v113 = vld [vmem:[#allocation3 + $0x10] sm:$0xf]
    %v114 = vld [vmem:[#allocation3 + $0x14] sm:$0xf]
    %v115 = vld [vmem:[#allocation3 + $0x18] sm:$0xf]
    %v116 = vld [vmem:[#allocation3 + $0x1c] sm:$0xf]
    %v117 = vld [vmem:[#allocation3 + $0x20] sm:$0xf]
    %v118 = vld [vmem:[#allocation3 + $0x24] sm:$0xf]
    %v119 = vld [vmem:[#allocation3 + $0x28] sm:$0xf]
    %v120 = vld [vmem:[#allocation3 + $0x2c] sm:$0xf]
    %v121 = vld [vmem:[#allocation3 + $0x30] sm:$0xf]
    %v122 = vld [vmem:[#allocation3 + $0x34] sm:$0xf]
    %v123 = vld [vmem:[#allocation3 + $0x38] sm:$0xf]
    %v124 = vld [vmem:[#allocation3 + $0x3c] sm:$0xf]
    %v125 = vld [vmem:[#allocation3 + $0x40] sm:$0xf]
    %v126 = vld [vmem:[#allocation3 + $0x44] sm:$0xf]
    %v127 = vld [vmem:[#allocation3 + $0x48] sm:$0xf]
    %v128 = vld [vmem:[#allocation3 + $0x4c] sm:$0xf]
    %v129 = vld [vmem:[#allocation3 + $0x50] sm:$0xf]
    %v130 = vld [vmem:[#allocation3 + $0x54] sm:$0xf]
    %v131 = vld [vmem:[#allocation3 + $0x58] sm:$0xf]
    %v132 = vld [vmem:[#allocation3 + $0x5c] sm:$0xf]
    %v133 = vld [vmem:[#allocation3 + $0x60] sm:$0xf]
    %v134 = vld [vmem:[#allocation3 + $0x64] sm:$0xf]
    %v135 = vld [vmem:[#allocation3 + $0x68] sm:$0xf]
    %v136 = vld [vmem:[#allocation3 + $0x6c] sm:$0xf]
    %v137 = vld [vmem:[#allocation3 + $0x70] sm:$0xf]
    %v138 = vld [vmem:[#allocation3 + $0x74] sm:$0xf]
    %v139 = vld [vmem:[#allocation3 + $0x78] sm:$0xf]
    %v140 = vld [vmem:[#allocation3 + $0x7c] sm:$0xf]
    %v141 = vld [vmem:[#allocation6] sm:$0xf]
    %v142 = vld [vmem:[#allocation6 + $0x4] sm:$0xf]
    %v143 = vld [vmem:[#allocation6 + $0x8] sm:$0xf]
    %v144 = vld [vmem:[#allocation6 + $0xc] sm:$0xf]
    %v145 = vld [vmem:[#allocation6 + $0x10] sm:$0xf]
    %v146 = vld [vmem:[#allocation6 + $0x14] sm:$0xf]
    %v147 = vld [vmem:[#allocation6 + $0x18] sm:$0xf]
    %v148 = vld [vmem:[#allocation6 + $0x1c] sm:$0xf]
    %v149 = vld [vmem:[#allocation6 + $0x20] sm:$0xf]
    %v150 = vld [vmem:[#allocation6 + $0x24] sm:$0xf]
    %v151 = vld [vmem:[#allocation6 + $0x28] sm:$0xf]
    %v152 = vld [vmem:[#allocation6 + $0x2c] sm:$0xf]
    %v153 = vld [vmem:[#allocation6 + $0x30] sm:$0xf]
    %v154 = vld [vmem:[#allocation6 + $0x34] sm:$0xf]
    %v155 = vld [vmem:[#allocation6 + $0x38] sm:$0xf]
    %v156 = vld [vmem:[#allocation6 + $0x3c] sm:$0xf]
    %v189 = vunpack.c.l.b16 %v109
    %v190 = vunpack.c.l.b16 %v110
    %v191 = vunpack.c.l.b16 %v111
    %v192 = vunpack.c.l.b16 %v112
    %v193 = vunpack.c.l.b16 %v113
    %v194 = vunpack.c.l.b16 %v114
    %v195 = vunpack.c.l.b16 %v115
    %v196 = vunpack.c.l.b16 %v116
    %v197 = vunpack.c.l.b16 %v117
    %v198 = vunpack.c.l.b16 %v118
    %v199 = vunpack.c.l.b16 %v119
    %v200 = vunpack.c.l.b16 %v120
    %v201 = vunpack.c.l.b16 %v121
    %v202 = vunpack.c.l.b16 %v122
    %v203 = vunpack.c.l.b16 %v123
    %v204 = vunpack.c.l.b16 %v124
    %v205 = vunpack.c.l.b16 %v125
    %v206 = vunpack.c.l.b16 %v126
    %v207 = vunpack.c.l.b16 %v127
    %v208 = vunpack.c.l.b16 %v128
    %v209 = vunpack.c.l.b16 %v129
    %v210 = vunpack.c.l.b16 %v130
    %v211 = vunpack.c.l.b16 %v131
    %v212 = vunpack.c.l.b16 %v132
    %v213 = vunpack.c.l.b16 %v133
    %v214 = vunpack.c.l.b16 %v134
    %v215 = vunpack.c.l.b16 %v135
    %v216 = vunpack.c.l.b16 %v136
    %v217 = vunpack.c.l.b16 %v137
    %v218 = vunpack.c.l.b16 %v138
    %v219 = vunpack.c.l.b16 %v139
    %v220 = vunpack.c.l.b16 %v140
    %v221 = vpack.c.b16 %v190, %v189
    %v222 = vpack.c.b16 %v192, %v191
    %v223 = vpack.c.b16 %v194, %v193
    %v224 = vpack.c.b16 %v196, %v195
    %v225 = vpack.c.b16 %v198, %v197
    %v226 = vpack.c.b16 %v200, %v199
    %v227 = vpack.c.b16 %v202, %v201
    %v228 = vpack.c.b16 %v204, %v203
    %v229 = vpack.c.b16 %v206, %v205
    %v230 = vpack.c.b16 %v208, %v207
    %v231 = vpack.c.b16 %v210, %v209
    %v232 = vpack.c.b16 %v212, %v211
    %v233 = vpack.c.b16 %v214, %v213
    %v234 = vpack.c.b16 %v216, %v215
    %v235 = vpack.c.b16 %v218, %v217
    %v236 = vpack.c.b16 %v220, %v219
    %v269 = vunpack.c.l.b16 %v141
    %v270 = vunpack.c.l.b16 %v142
    %v271 = vunpack.c.l.b16 %v143
    %v272 = vunpack.c.l.b16 %v144
    %v273 = vunpack.c.l.b16 %v145
    %v274 = vunpack.c.l.b16 %v146
    %v275 = vunpack.c.l.b16 %v147
    %v276 = vunpack.c.l.b16 %v148
    %v277 = vunpack.c.l.b16 %v149
    %v278 = vunpack.c.l.b16 %v150
    %v279 = vunpack.c.l.b16 %v151
    %v280 = vunpack.c.l.b16 %v152
    %v281 = vunpack.c.l.b16 %v153
    %v282 = vunpack.c.l.b16 %v154
    %v283 = vunpack.c.l.b16 %v155
    %v284 = vunpack.c.l.b16 %v156
    %v285 = vpack.c.b16 %v270, %v269
    %v286 = vpack.c.b16 %v272, %v271
    %v287 = vpack.c.b16 %v274, %v273
    %v288 = vpack.c.b16 %v276, %v275
    %v289 = vpack.c.b16 %v278, %v277
    %v290 = vpack.c.b16 %v280, %v279
    %v291 = vpack.c.b16 %v282, %v281
    %v292 = vpack.c.b16 %v284, %v283
    %301 = vmatprep.subr.bf16.mxu0 0
    %302 = vmatpush1.bf16.msra.mxu0 %v285
    %303 = vmatprep.subr.bf16.mxu0 0
    %304 = vmatpush1.bf16.msra.mxu0 %v286
    %305 = vmatprep.subr.bf16.mxu0 0
    %306 = vmatpush1.bf16.msra.mxu0 %v287
    %307 = vmatprep.subr.bf16.mxu0 0
    %308 = vmatpush1.bf16.msra.mxu0 %v288
    %309 = vmatprep.subr.bf16.mxu0 0
    %310 = vmatpush1.bf16.msra.mxu0 %v289
    %311 = vmatprep.subr.bf16.mxu0 0
    %312 = vmatpush1.bf16.msra.mxu0 %v290
    %313 = vmatprep.subr.bf16.mxu0 0
    %314 = vmatpush1.bf16.msra.mxu0 %v291
    %315 = vmatprep.subr.bf16.mxu0 0
    %316 = vmatpush1.bf16.msra.mxu0 %v292
    %317 = vmatprep.subr.bf16.mxu0 0
    %318 = vmatpush1.bf16.msra.mxu0 0
    %319 = vmatprep.subr.bf16.mxu0 0
    %320 = vmatpush1.bf16.msra.mxu0 0
    %321 = vmatprep.subr.bf16.mxu0 0
    %322 = vmatpush1.bf16.msra.mxu0 0
    %323 = vmatprep.subr.bf16.mxu0 0
    %324 = vmatpush1.bf16.msra.mxu0 0
    %325 = vmatprep.subr.bf16.mxu0 0
    %326 = vmatpush1.bf16.msra.mxu0 0
    %327 = vmatprep.subr.bf16.mxu0 0
    %328 = vmatpush1.bf16.msra.mxu0 0
    %329 = vmatprep.subr.bf16.mxu0 0
    %330 = vmatpush1.bf16.msra.mxu0 0
    %331 = vmatprep.subr.bf16.mxu0 0
    %332 = vmatpush1.bf16.msra.mxu0 0
    %333 = vmatprep.mubr.bf16.mxu0 0
    %334 = vmatmul.mubr.bf16.gmra.mrb[0].mxu0 %v221
    %v335 = vpop.f32.mrb[0].mxu0
    %v336 = vadd.f32 0.0, %v335
    %v337 = vpop.f32.mrb[0].mxu0
    %v338 = vpop.f32.mrb[0].mxu0
    %v339 = vadd.f32 0.0, %v338
    %v340 = vpop.f32.mrb[0].mxu0
    %341 = vmatprep.mubr.bf16.mxu0 0
    %342 = vmatmul.mubr.bf16.gmra.mrb[0].mxu0 %v222
    %v343 = vpop.f32.mrb[0].mxu0
    %v344 = vadd.f32 0.0, %v343
    %v345 = vpop.f32.mrb[0].mxu0
    %v346 = vpop.f32.mrb[0].mxu0
    %v347 = vadd.f32 0.0, %v346
    %v348 = vpop.f32.mrb[0].mxu0
    %349 = vmatprep.mubr.bf16.mxu0 0
    %350 = vmatmul.mubr.bf16.gmra.mrb[0].mxu0 %v223
    %v351 = vpop.f32.mrb[0].mxu0
    %v352 = vadd.f32 0.0, %v351
    %v353 = vpop.f32.mrb[0].mxu0
    %v354 = vpop.f32.mrb[0].mxu0
    %v355 = vadd.f32 0.0, %v354
    %v356 = vpop.f32.mrb[0].mxu0
    %357 = vmatprep.mubr.bf16.mxu0 0
    %358 = vmatmul.mubr.bf16.gmra.mrb[0].mxu0 %v224
    %v359 = vpop.f32.mrb[0].mxu0
    %v360 = vadd.f32 0.0, %v359
    %v361 = vpop.f32.mrb[0].mxu0
    %v362 = vpop.f32.mrb[0].mxu0
    %v363 = vadd.f32 0.0, %v362
    %v364 = vpop.f32.mrb[0].mxu0
    %365 = vmatprep.mubr.bf16.mxu0 0
    %366 = vmatmul.mubr.bf16.gmra.mrb[0].mxu0 %v225
    %v367 = vpop.f32.mrb[0].mxu0
    %v368 = vadd.f32 0.0, %v367
    %v369 = vpop.f32.mrb[0].mxu0
    %v370 = vpop.f32.mrb[0].mxu0
    %v371 = vadd.f32 0.0, %v370
    %v372 = vpop.f32.mrb[0].mxu0
    %373 = vmatprep.mubr.bf16.mxu0 0
    %374 = vmatmul.mubr.bf16.gmra.mrb[0].mxu0 %v226
    %v375 = vpop.f32.mrb[0].mxu0
    %v376 = vadd.f32 0.0, %v375
    %v377 = vpop.f32.mrb[0].mxu0
    %v378 = vpop.f32.mrb[0].mxu0
    %v379 = vadd.f32 0.0, %v378
    %v380 = vpop.f32.mrb[0].mxu0
    %381 = vmatprep.mubr.bf16.mxu0 0
    %382 = vmatmul.mubr.bf16.gmra.mrb[0].mxu0 %v227
    %v383 = vpop.f32.mrb[0].mxu0
    %v384 = vadd.f32 0.0, %v383
    %v385 = vpop.f32.mrb[0].mxu0
    %v386 = vpop.f32.mrb[0].mxu0
    %v387 = vadd.f32 0.0, %v386
    %v388 = vpop.f32.mrb[0].mxu0
    %389 = vmatprep.mubr.bf16.mxu0 0
    %390 = vmatmul.mubr.bf16.gmra.mrb[0].mxu0 %v228
    %v391 = vpop.f32.mrb[0].mxu0
    %v392 = vadd.f32 0.0, %v391
    %v393 = vpop.f32.mrb[0].mxu0
    %v394 = vpop.f32.mrb[0].mxu0
    %v395 = vadd.f32 0.0, %v394
    %v396 = vpop.f32.mrb[0].mxu0
    %397 = vmatprep.mubr.bf16.mxu0 0
    %398 = vmatmul.mubr.bf16.gmra.mrb[0].mxu0 %v229
    %v399 = vpop.f32.mrb[0].mxu0
    %v400 = vadd.f32 0.0, %v399
    %v401 = vpop.f32.mrb[0].mxu0
    %v402 = vpop.f32.mrb[0].mxu0
    %v403 = vadd.f32 0.0, %v402
    %v404 = vpop.f32.mrb[0].mxu0
    %405 = vmatprep.mubr.bf16.mxu0 0
    %406 = vmatmul.mubr.bf16.gmra.mrb[0].mxu0 %v230
    %v407 = vpop.f32.mrb[0].mxu0
    %v408 = vadd.f32 0.0, %v407
    %v409 = vpop.f32.mrb[0].mxu0
    %v410 = vpop.f32.mrb[0].mxu0
    %v411 = vadd.f32 0.0, %v410
    %v412 = vpop.f32.mrb[0].mxu0
    %413 = vmatprep.mubr.bf16.mxu0 0
    %414 = vmatmul.mubr.bf16.gmra.mrb[0].mxu0 %v231
    %v415 = vpop.f32.mrb[0].mxu0
    %v416 = vadd.f32 0.0, %v415
    %v417 = vpop.f32.mrb[0].mxu0
    %v418 = vpop.f32.mrb[0].mxu0
    %v419 = vadd.f32 0.0, %v418
    %v420 = vpop.f32.mrb[0].mxu0
    %421 = vmatprep.mubr.bf16.mxu0 0
    %422 = vmatmul.mubr.bf16.gmra.mrb[0].mxu0 %v232
    %v423 = vpop.f32.mrb[0].mxu0
    %v424 = vadd.f32 0.0, %v423
    %v425 = vpop.f32.mrb[0].mxu0
    %v426 = vpop.f32.mrb[0].mxu0
    %v427 = vadd.f32 0.0, %v426
    %v428 = vpop.f32.mrb[0].mxu0
    %429 = vmatprep.mubr.bf16.mxu0 0
    %430 = vmatmul.mubr.bf16.gmra.mrb[0].mxu0 %v233
    %v431 = vpop.f32.mrb[0].mxu0
    %v432 = vadd.f32 0.0, %v431
    %v433 = vpop.f32.mrb[0].mxu0
    %v434 = vpop.f32.mrb[0].mxu0
    %v435 = vadd.f32 0.0, %v434
    %v436 = vpop.f32.mrb[0].mxu0
    %437 = vmatprep.mubr.bf16.mxu0 0
    %438 = vmatmul.mubr.bf16.gmra.mrb[0].mxu0 %v234
    %v439 = vpop.f32.mrb[0].mxu0
    %v440 = vadd.f32 0.0, %v439
    %v441 = vpop.f32.mrb[0].mxu0
    %v442 = vpop.f32.mrb[0].mxu0
    %v443 = vadd.f32 0.0, %v442
    %v444 = vpop.f32.mrb[0].mxu0
    %445 = vmatprep.mubr.bf16.mxu0 0
    %446 = vmatmul.mubr.bf16.gmra.mrb[0].mxu0 %v235
    %v447 = vpop.f32.mrb[0].mxu0
    %v448 = vadd.f32 0.0, %v447
    %v449 = vpop.f32.mrb[0].mxu0
    %v450 = vpop.f32.mrb[0].mxu0
    %v451 = vadd.f32 0.0, %v450
    %v452 = vpop.f32.mrb[0].mxu0
    %453 = vmatprep.mubr.bf16.mxu0 0
    %454 = vmatmul.mubr.bf16.gmra.mrb[0].mxu0 %v236
    %v455 = vpop.f32.mrb[0].mxu0
    %v456 = vadd.f32 0.0, %v455
    %v457 = vpop.f32.mrb[0].mxu0
    %v458 = vpop.f32.mrb[0].mxu0
    %v459 = vadd.f32 0.0, %v458
    %v460 = vpop.f32.mrb[0].mxu0
    %461 = vdwg.mxu0
    %v462 = vadd.f32 %v77, %v336
    %v463 = vadd.f32 %v78, %v339
    %v464 = vadd.f32 %v79, %v344
    %v465 = vadd.f32 %v80, %v347
    %v466 = vadd.f32 %v81, %v352
    %v467 = vadd.f32 %v82, %v355
    %v468 = vadd.f32 %v83, %v360
    %v469 = vadd.f32 %v84, %v363
    %v470 = vadd.f32 %v85, %v368
    %v471 = vadd.f32 %v86, %v371
    %v472 = vadd.f32 %v87, %v376
    %v473 = vadd.f32 %v88, %v379
    %v474 = vadd.f32 %v89, %v384
    %v475 = vadd.f32 %v90, %v387
    %v476 = vadd.f32 %v91, %v392
    %v477 = vadd.f32 %v92, %v395
    %v478 = vadd.f32 %v93, %v400
    %v479 = vadd.f32 %v94, %v403
    %v480 = vadd.f32 %v95, %v408
    %v481 = vadd.f32 %v96, %v411
    %v482 = vadd.f32 %v97, %v416
    %v483 = vadd.f32 %v98, %v419
    %v484 = vadd.f32 %v99, %v424
    %v485 = vadd.f32 %v100, %v427
    %v486 = vadd.f32 %v101, %v432
    %v487 = vadd.f32 %v102, %v435
    %v488 = vadd.f32 %v103, %v440
    %v489 = vadd.f32 %v104, %v443
    %v490 = vadd.f32 %v105, %v448
    %v491 = vadd.f32 %v106, %v451
    %v492 = vadd.f32 %v107, %v456
    %v493 = vadd.f32 %v108, %v459
    %494 = vst [vmem:[#allocation2] sm:$0xff] %v462
    %495 = vst [vmem:[#allocation2 + $0x8] sm:$0xff] %v463
    %496 = vst [vmem:[#allocation2 + $0x10] sm:$0xff] %v464
    %497 = vst [vmem:[#allocation2 + $0x18] sm:$0xff] %v465
    %498 = vst [vmem:[#allocation2 + $0x20] sm:$0xff] %v466
    %499 = vst [vmem:[#allocation2 + $0x28] sm:$0xff] %v467
    %500 = vst [vmem:[#allocation2 + $0x30] sm:$0xff] %v468
    %501 = vst [vmem:[#allocation2 + $0x38] sm:$0xff] %v469
    %502 = vst [vmem:[#allocation2 + $0x40] sm:$0xff] %v470
    %503 = vst [vmem:[#allocation2 + $0x48] sm:$0xff] %v471
    %504 = vst [vmem:[#allocation2 + $0x50] sm:$0xff] %v472
    %505 = vst [vmem:[#allocation2 + $0x58] sm:$0xff] %v473
    %506 = vst [vmem:[#allocation2 + $0x60] sm:$0xff] %v474
    %507 = vst [vmem:[#allocation2 + $0x68] sm:$0xff] %v475
    %508 = vst [vmem:[#allocation2 + $0x70] sm:$0xff] %v476
    %509 = vst [vmem:[#allocation2 + $0x78] sm:$0xff] %v477
    %510 = vst [vmem:[#allocation2 + $0x80] sm:$0xff] %v478
    %511 = vst [vmem:[#allocation2 + $0x88] sm:$0xff] %v479
    %512 = vst [vmem:[#allocation2 + $0x90] sm:$0xff] %v480
    %513 = vst [vmem:[#allocation2 + $0x98] sm:$0xff] %v481
    %514 = vst [vmem:[#allocation2 + $0xa0] sm:$0xff] %v482
    %515 = vst [vmem:[#allocation2 + $0xa8] sm:$0xff] %v483
    %516 = vst [vmem:[#allocation2 + $0xb0] sm:$0xff] %v484
    %517 = vst [vmem:[#allocation2 + $0xb8] sm:$0xff] %v485
    %518 = vst [vmem:[#allocation2 + $0xc0] sm:$0xff] %v486
    %519 = vst [vmem:[#allocation2 + $0xc8] sm:$0xff] %v487
    %520 = vst [vmem:[#allocation2 + $0xd0] sm:$0xff] %v488
    %521 = vst [vmem:[#allocation2 + $0xd8] sm:$0xff] %v489
    %522 = vst [vmem:[#allocation2 + $0xe0] sm:$0xff] %v490
    %523 = vst [vmem:[#allocation2 + $0xe8] sm:$0xff] %v491
    %524 = vst [vmem:[#allocation2 + $0xf0] sm:$0xff] %v492
    %525 = vst [vmem:[#allocation2 + $0xf8] sm:$0xff] %v493
    // Predicated region
    $region22: #{tpu_custom_call.1} parent=1 // pred_check
      %p526 = pneg %p41
    $region23: #{tpu_custom_call.1} parent=1 // pred_check_branch
      %528 = sbr.rel (%p526) target = $region25
    $region24: #{tpu_custom_call.1} parent=1 // pred_region
      %v529 = vld [vmem:[#allocation2] sm:$0xff]
      %v530 = vld [vmem:[#allocation2 + $0x8] sm:$0xff]
      %v531 = vld [vmem:[#allocation2 + $0x10] sm:$0xff]
      %v532 = vld [vmem:[#allocation2 + $0x18] sm:$0xff]
      %v533 = vld [vmem:[#allocation2 + $0x20] sm:$0xff]
      %v534 = vld [vmem:[#allocation2 + $0x28] sm:$0xff]
      %v535 = vld [vmem:[#allocation2 + $0x30] sm:$0xff]
      %v536 = vld [vmem:[#allocation2 + $0x38] sm:$0xff]
      %v537 = vld [vmem:[#allocation2 + $0x40] sm:$0xff]
      %v538 = vld [vmem:[#allocation2 + $0x48] sm:$0xff]
      %v539 = vld [vmem:[#allocation2 + $0x50] sm:$0xff]
      %v540 = vld [vmem:[#allocation2 + $0x58] sm:$0xff]
      %v541 = vld [vmem:[#allocation2 + $0x60] sm:$0xff]
      %v542 = vld [vmem:[#allocation2 + $0x68] sm:$0xff]
      %v543 = vld [vmem:[#allocation2 + $0x70] sm:$0xff]
      %v544 = vld [vmem:[#allocation2 + $0x78] sm:$0xff]
      %v545 = vld [vmem:[#allocation2 + $0x80] sm:$0xff]
      %v546 = vld [vmem:[#allocation2 + $0x88] sm:$0xff]
      %v547 = vld [vmem:[#allocation2 + $0x90] sm:$0xff]
      %v548 = vld [vmem:[#allocation2 + $0x98] sm:$0xff]
      %v549 = vld [vmem:[#allocation2 + $0xa0] sm:$0xff]
      %v550 = vld [vmem:[#allocation2 + $0xa8] sm:$0xff]
      %v551 = vld [vmem:[#allocation2 + $0xb0] sm:$0xff]
      %v552 = vld [vmem:[#allocation2 + $0xb8] sm:$0xff]
      %v553 = vld [vmem:[#allocation2 + $0xc0] sm:$0xff]
      %v554 = vld [vmem:[#allocation2 + $0xc8] sm:$0xff]
      %v555 = vld [vmem:[#allocation2 + $0xd0] sm:$0xff]
      %v556 = vld [vmem:[#allocation2 + $0xd8] sm:$0xff]
      %v557 = vld [vmem:[#allocation2 + $0xe0] sm:$0xff]
      %v558 = vld [vmem:[#allocation2 + $0xe8] sm:$0xff]
      %v559 = vld [vmem:[#allocation2 + $0xf0] sm:$0xff]
      %v560 = vld [vmem:[#allocation2 + $0xf8] sm:$0xff]
      %v561 = vpack.c.bf16 %v530, %v529
      %v562 = vpack.c.bf16 %v532, %v531
      %v563 = vpack.c.bf16 %v534, %v533
      %v564 = vpack.c.bf16 %v536, %v535
      %v565 = vpack.c.bf16 %v538, %v537
      %v566 = vpack.c.bf16 %v540, %v539
      %v567 = vpack.c.bf16 %v542, %v541
      %v568 = vpack.c.bf16 %v544, %v543
      %v569 = vpack.c.bf16 %v546, %v545
      %v570 = vpack.c.bf16 %v548, %v547
      %v571 = vpack.c.bf16 %v550, %v549
      %v572 = vpack.c.bf16 %v552, %v551
      %v573 = vpack.c.bf16 %v554, %v553
      %v574 = vpack.c.bf16 %v556, %v555
      %v575 = vpack.c.bf16 %v558, %v557
      %v576 = vpack.c.bf16 %v560, %v559
      %v593 = vunpack.c.l.b16 %v561
      %v594 = vunpack.c.h.b16 %v561
      %v595 = vunpack.c.l.b16 %v562
      %v596 = vunpack.c.h.b16 %v562
      %v597 = vunpack.c.l.b16 %v563
      %v598 = vunpack.c.h.b16 %v563
      %v599 = vunpack.c.l.b16 %v564
      %v600 = vunpack.c.h.b16 %v564
      %v601 = vunpack.c.l.b16 %v565
      %v602 = vunpack.c.h.b16 %v565
      %v603 = vunpack.c.l.b16 %v566
      %v604 = vunpack.c.h.b16 %v566
      %v605 = vunpack.c.l.b16 %v567
      %v606 = vunpack.c.h.b16 %v567
      %v607 = vunpack.c.l.b16 %v568
      %v608 = vunpack.c.h.b16 %v568
      %v609 = vunpack.c.l.b16 %v569
      %v610 = vunpack.c.h.b16 %v569
      %v611 = vunpack.c.l.b16 %v570
      %v612 = vunpack.c.h.b16 %v570
      %v613 = vunpack.c.l.b16 %v571
      %v614 = vunpack.c.h.b16 %v571
      %v615 = vunpack.c.l.b16 %v572
      %v616 = vunpack.c.h.b16 %v572
      %v617 = vunpack.c.l.b16 %v573
      %v618 = vunpack.c.h.b16 %v573
      %v619 = vunpack.c.l.b16 %v574
      %v620 = vunpack.c.h.b16 %v574
      %v621 = vunpack.c.l.b16 %v575
      %v622 = vunpack.c.h.b16 %v575
      %v623 = vunpack.c.l.b16 %v576
      %v624 = vunpack.c.h.b16 %v576
      %v625 = vpack.c.b16 %v593, %v593
      %v626 = vpack.c.b16 %v594, %v594
      %v627 = vpack.c.b16 %v595, %v595
      %v628 = vpack.c.b16 %v596, %v596
      %v629 = vpack.c.b16 %v597, %v597
      %v630 = vpack.c.b16 %v598, %v598
      %v631 = vpack.c.b16 %v599, %v599
      %v632 = vpack.c.b16 %v600, %v600
      %v633 = vpack.c.b16 %v601, %v601
      %v634 = vpack.c.b16 %v602, %v602
      %v635 = vpack.c.b16 %v603, %v603
      %v636 = vpack.c.b16 %v604, %v604
      %v637 = vpack.c.b16 %v605, %v605
      %v638 = vpack.c.b16 %v606, %v606
      %v639 = vpack.c.b16 %v607, %v607
      %v640 = vpack.c.b16 %v608, %v608
      %v641 = vpack.c.b16 %v609, %v609
      %v642 = vpack.c.b16 %v610, %v610
      %v643 = vpack.c.b16 %v611, %v611
      %v644 = vpack.c.b16 %v612, %v612
      %v645 = vpack.c.b16 %v613, %v613
      %v646 = vpack.c.b16 %v614, %v614
      %v647 = vpack.c.b16 %v615, %v615
      %v648 = vpack.c.b16 %v616, %v616
      %v649 = vpack.c.b16 %v617, %v617
      %v650 = vpack.c.b16 %v618, %v618
      %v651 = vpack.c.b16 %v619, %v619
      %v652 = vpack.c.b16 %v620, %v620
      %v653 = vpack.c.b16 %v621, %v621
      %v654 = vpack.c.b16 %v622, %v622
      %v655 = vpack.c.b16 %v623, %v623
      %v656 = vpack.c.b16 %v624, %v624
      %689 = vst [vmem:[#allocation8] sm:$0xf] %v625
      %690 = vst [vmem:[#allocation8 + $0x4] sm:$0xf] %v626
      %691 = vst [vmem:[#allocation8 + $0x8] sm:$0xf] %v627
      %692 = vst [vmem:[#allocation8 + $0xc] sm:$0xf] %v628
      %693 = vst [vmem:[#allocation8 + $0x10] sm:$0xf] %v629
      %694 = vst [vmem:[#allocation8 + $0x14] sm:$0xf] %v630
      %695 = vst [vmem:[#allocation8 + $0x18] sm:$0xf] %v631
      %696 = vst [vmem:[#allocation8 + $0x1c] sm:$0xf] %v632
      %697 = vst [vmem:[#allocation8 + $0x20] sm:$0xf] %v633
      %698 = vst [vmem:[#allocation8 + $0x24] sm:$0xf] %v634
      %699 = vst [vmem:[#allocation8 + $0x28] sm:$0xf] %v635
      %700 = vst [vmem:[#allocation8 + $0x2c] sm:$0xf] %v636
      %701 = vst [vmem:[#allocation8 + $0x30] sm:$0xf] %v637
      %702 = vst [vmem:[#allocation8 + $0x34] sm:$0xf] %v638
      %703 = vst [vmem:[#allocation8 + $0x38] sm:$0xf] %v639
      %704 = vst [vmem:[#allocation8 + $0x3c] sm:$0xf] %v640
      %705 = vst [vmem:[#allocation8 + $0x40] sm:$0xf] %v641
      %706 = vst [vmem:[#allocation8 + $0x44] sm:$0xf] %v642
      %707 = vst [vmem:[#allocation8 + $0x48] sm:$0xf] %v643
      %708 = vst [vmem:[#allocation8 + $0x4c] sm:$0xf] %v644
      %709 = vst [vmem:[#allocation8 + $0x50] sm:$0xf] %v645
      %710 = vst [vmem:[#allocation8 + $0x54] sm:$0xf] %v646
      %711 = vst [vmem:[#allocation8 + $0x58] sm:$0xf] %v647
      %712 = vst [vmem:[#allocation8 + $0x5c] sm:$0xf] %v648
      %713 = vst [vmem:[#allocation8 + $0x60] sm:$0xf] %v649
      %714 = vst [vmem:[#allocation8 + $0x64] sm:$0xf] %v650
      %715 = vst [vmem:[#allocation8 + $0x68] sm:$0xf] %v651
      %716 = vst [vmem:[#allocation8 + $0x6c] sm:$0xf] %v652
      %717 = vst [vmem:[#allocation8 + $0x70] sm:$0xf] %v653
      %718 = vst [vmem:[#allocation8 + $0x74] sm:$0xf] %v654
      %719 = vst [vmem:[#allocation8 + $0x78] sm:$0xf] %v655
      %720 = vst [vmem:[#allocation8 + $0x7c] sm:$0xf] %v656
    $region25: #{tpu_custom_call.1} parent=1 // pred_fallthru
      _
    // Predicated region
    $region26: #{tpu_custom_call.1} parent=1 // pred_check
      _
    $region27: #{tpu_custom_call.1} parent=1 // pred_check_branch
      %722 = sbr.rel (0) target = $region29
    $region28: #{tpu_custom_call.1} parent=1 // pred_region
      %s724 = ssub.s32 2048, 2048
      %725 = vsyncadd [#allocation5], %s724
      %s726 = sshll.u32 [#allocation8], 4
      %s727 = int_to_ptr.vmem [resolvable:$true] %s726
      %732 = dma.vmem_to_hbm [thread:$0]  %s727, 2048, %s2, [#allocation5], 64, 64, 4
    $region29: #{tpu_custom_call.1} parent=1 // pred_fallthru
      _
    // Predicated region
    $region30: #{tpu_custom_call.1} parent=1 // pred_check
      _
    $region31: #{tpu_custom_call.1} parent=1 // pred_check_branch
      %734 = sbr.rel (0) target = $region33
    $region32: #{tpu_custom_call.1} parent=1 // pred_region
      %735 = dma.done [#allocation5], 2048
    $region33: #{tpu_custom_call.1} parent=1 // pred_fallthru
      _
    %736 = vsyncpa [#allocation4], 1
    %737 = vsyncpa [#allocation7], 1
    %738 = vsyncpa [#allocation5], 1

</llo_original>
